<compile_context>
chip_gen: v7x
topology: tpu7x:2x2x1
jax: 0.10.0
libtpu: 0.0.40
codegen_flags: <defaults>
</compile_context>

<pallas_src>
import jax
import jax.numpy as jnp
from jax.experimental import pallas as pl
from jax.experimental.pallas import tpu as pltpu


# ---------------------------------------------------------------------------
# Kernel 1: fused theta/phi/g projection (one wide matmul) + 2x2 maxpool.
#   x_ref    : (1, 4, TKV, C)        window-corner ordered tokens (bf16)
#   w_ref    : (C, 2*C8 + C2)        concat(w_theta^T, w_phi^T, w_g^T) (bf16)
#   theta_ref: (1, 4, TKV, C8)       per-token theta (bf16)
#   phi_ref  : (1, TKV, C8)          pooled phi (bf16)
#   g_ref    : (1, TKV, C2)          pooled g (bf16)
# ---------------------------------------------------------------------------
def _proj_pool_kernel(x_ref, w_ref, theta_ref, phi_ref, g_ref):
    _, _, tkv, c = x_ref.shape
    c8 = theta_ref.shape[-1]
    c2 = g_ref.shape[-1]

    x = x_ref[0].reshape(4 * tkv, c)                                   # bf16
    y = jnp.dot(x, w_ref[...], preferred_element_type=jnp.float32)     # (4*TKV, K)

    # theta is not pooled: one row per token (corner-major window order).
    theta_ref[0] = y[:, :c8].reshape(4, tkv, c8).astype(theta_ref.dtype)
    # phi / g: 2x2 maxpool == max over the 4 window corners (the 1x1 conv is
    # pointwise, so pooling after the projection is exact).
    phi_ref[0] = jnp.max(y[:, c8:2 * c8].reshape(4, tkv, c8),
                         axis=0).astype(phi_ref.dtype)
    g_ref[0] = jnp.max(y[:, 2 * c8:].reshape(4, tkv, c2),
                       axis=0).astype(g_ref.dtype)


# ---------------------------------------------------------------------------
# Kernel 2: query-tiled attention + output projection (no residual here).
#   theta_ref: (1, TQ, C8)   bf16, window-token order
#   phiT_ref : (1, C8, HW4)  bf16, pre-transposed -> plain NN logits dot
#   g_ref    : (1, HW4, C2)  bf16
#   wa_ref   : (C2, C)       bf16
#   o_ref    : (1, TQ, C)    f32, window-token order
# ---------------------------------------------------------------------------
def _attn_kernel(theta_ref, phiT_ref, g_ref, wa_ref, o_ref):
    theta = theta_ref[0]                                               # (TQ, C8)
    phiT = phiT_ref[0]                                                 # (C8, HW4)
    g = g_ref[0]                                                       # (HW4, C2)

    logits = jnp.dot(theta, phiT, preferred_element_type=jnp.float32)  # (TQ, HW4)
    m = jnp.max(logits, axis=-1, keepdims=True)
    pb = jnp.exp(logits - m).astype(jnp.bfloat16)                      # (TQ, HW4)

    # Deferred softmax normalization: normalize the small (TQ, C2) result
    # instead of the (TQ, HW4) weights.  Row-sum kept in f32.
    s = jnp.sum(pb.astype(jnp.float32), axis=-1, keepdims=True)        # (TQ, 1)
    attn_g = jnp.dot(pb, g, preferred_element_type=jnp.float32)        # (TQ, C2)
    attn_g = attn_g * pl.reciprocal(s, approx=True)

    out = jnp.dot(attn_g.astype(jnp.bfloat16), wa_ref[...],
                  preferred_element_type=jnp.float32)                  # (TQ, C)
    o_ref[0] = out.astype(o_ref.dtype)


# ---------------------------------------------------------------------------
# helpers
# ---------------------------------------------------------------------------
def _pick_tile(total, cap):
    """Largest multiple-of-8 divisor of `total` that is <= cap.

    Falls back to 8 (never to `total`) when `total` exceeds the cap, so the
    VMEM budget can not silently blow up.  Callers guarantee total % 8 == 0.
    """
    cap = max(8, min(cap, total))
    best = total if total <= cap else 8
    for cand in range(8, cap + 1, 8):
        if total % cand == 0:
            best = cand
    return best


def _vmem_capacity_bytes():
    """Physical per-core VMEM; conservative 64 MiB (v7x) if unqueryable."""
    try:
        info = pltpu.get_tpu_info()
        for attr in ("vmem_capacity_bytes", "vmem_bytes", "vmem_size_bytes"):
            v = getattr(info, attr, None)
            if v:
                return int(v)
    except Exception:
        pass
    return 64 * 1024 * 1024


def _vmem_limit_bytes(vmem_cap, estimate):
    # Explicit scoped-VMEM request: >= 32 MiB, but leave 16 MiB headroom for
    # Mosaic internal scratch below the physical capacity (48 MiB cap on v7x,
    # 112 MiB on v5e/v6e).
    hard_cap = vmem_cap - 16 * 1024 * 1024
    return int(min(hard_cap, max(32 * 1024 * 1024, 2 * estimate)))


def self_attention_pallas(x, w_theta, w_phi, w_g, w_attn, sigma,
                          *, tq_max=1024, tkv_max=512):
    """x: (B, C, H, W) NCHW float32; weights in torch layout (Cout, Cin)."""
    B, C, H, W = x.shape
    assert C % 8 == 0 and H % 2 == 0 and W % 2 == 0
    HW, HW4 = H * W, (H // 2) * (W // 2)
    assert HW4 % 8 == 0, "H*W//4 must be a multiple of 8"
    C8, C2 = C // 8, C // 2
    K = 2 * C8 + C2                       # theta | phi | g fused width (= 3C/4)

    # ---- layout glue: one NCHW -> window-corner-token transpose, in bf16 ----
    # token order: (corner dy,dx) major, (window h2,w2) minor, channels last.
    xw = x.reshape(B, C, H // 2, 2, W // 2, 2)
    xw = jnp.transpose(xw, (0, 3, 5, 2, 4, 1))          # (B, 2, 2, H/2, W/2, C)
    x_win = xw.reshape(B, 4, HW4, C).astype(jnp.bfloat16)
    # TODO(synk): express the 2x2 corner gather via kernel-1's index_map over
    # an NHWC input so only one cheap NCHW->NHWC transpose remains.

    # weights: torch (Cout, Cin) -> (Cin, Cout); concat theta|phi|g; bf16
    w_tpg = jnp.concatenate(
        [jnp.transpose(w_theta), jnp.transpose(w_phi), jnp.transpose(w_g)],
        axis=1).astype(jnp.bfloat16)                                    # (C, K)
    wa = jnp.transpose(w_attn).astype(jnp.bfloat16)                     # (C2, C)
    sigma = jnp.asarray(sigma, jnp.float32).reshape(())

    # ---- generation-aware tile / VMEM budgeting ----
    vmem_cap = _vmem_capacity_bytes()
    small_vmem = vmem_cap <= 64 * 1024 * 1024
    # kernel-1 x block is 4*tkv*C bf16 and double-buffered; keep it ~1/4 VMEM.
    tkv_cap = max(8, (vmem_cap // 4) // (4 * C * 2 * 2))
    tkv = _pick_tile(HW4, min(tkv_max, tkv_cap))
    # kernel-2 live softmax slabs: f32 logits + bf16 exp + transients
    # (~10 B / element of (TQ, HW4)).
    logits_budget = (4 if small_vmem else 16) * 1024 * 1024
    tq_cap = max(8, logits_budget // (HW4 * 10))
    tq = _pick_tile(HW, min(tq_max, tq_cap))

    # ---- kernel 1: fused projection + corner maxpool ----
    est1 = (2 * (4 * tkv * C * 2) + 2 * (C * K * 2)
            + 2 * (4 * tkv * C8 * 2 + tkv * C8 * 2 + tkv * C2 * 2)
            + 4 * tkv * K * 4 + 4 * tkv * K * 2)
    theta_win, phi_p, g_p = pl.pallas_call(
        _proj_pool_kernel,
        out_shape=(
            jax.ShapeDtypeStruct((B, 4, HW4, C8), jnp.bfloat16),
            jax.ShapeDtypeStruct((B, HW4, C8), jnp.bfloat16),
            jax.ShapeDtypeStruct((B, HW4, C2), jnp.bfloat16),
        ),
        grid_spec=pltpu.PrefetchScalarGridSpec(
            num_scalar_prefetch=0,
            grid=(B, HW4 // tkv),
            in_specs=[
                pl.BlockSpec((1, 4, tkv, C), lambda b, j: (b, 0, j, 0)),
                pl.BlockSpec((C, K), lambda b, j: (0, 0)),
            ],
            out_specs=(
                pl.BlockSpec((1, 4, tkv, C8), lambda b, j: (b, 0, j, 0)),
                pl.BlockSpec((1, tkv, C8), lambda b, j: (b, j, 0)),
                pl.BlockSpec((1, tkv, C2), lambda b, j: (b, j, 0)),
            ),
        ),
        compiler_params=pltpu.CompilerParams(
            dimension_semantics=("parallel", "parallel"),
            vmem_limit_bytes=_vmem_limit_bytes(vmem_cap, est1)),
    )(x_win, w_tpg)

    # Same bytes, 3-D token view (reshape is free).
    theta_tok = theta_win.reshape(B, HW, C8)
    # Pre-transpose phi ONCE (tiny (B, HW4, C8) bf16 pass) so kernel 2 does a
    # plain NN dot with no per-q-tile XLU transpose / lane-offset slicing.
    phiT = jnp.transpose(phi_p, (0, 2, 1))

    # ---- kernel 2: query-tiled attention + output projection ----
    # TODO(synk): for very large images where the resident kv + live logits
    # approach ~40 MiB (reached 2x earlier on v7x's 64 MiB VMEM), switch to a
    # key-tiled online (flash-style) softmax.
    est2 = (2 * (tq * C8 * 2) + 2 * (C8 * HW4 * 2) + 2 * (HW4 * C2 * 2)
            + 2 * (C2 * C * 2) + 2 * (tq * C * 4)
            + tq * HW4 * 10 + tq * C2 * 4 + tq * C * 4)
    out_tok = pl.pallas_call(
        _attn_kernel,
        out_shape=jax.ShapeDtypeStruct((B, HW, C), jnp.float32),
        grid_spec=pltpu.PrefetchScalarGridSpec(
            num_scalar_prefetch=0,
            grid=(B, HW // tq),
            in_specs=[
                pl.BlockSpec((1, tq, C8), lambda b, q: (b, q, 0)),
                pl.BlockSpec((1, C8, HW4), lambda b, q: (b, 0, 0)),  # reused over q
                pl.BlockSpec((1, HW4, C2), lambda b, q: (b, 0, 0)),  # reused over q
                pl.BlockSpec((C2, C), lambda b, q: (0, 0)),
            ],
            out_specs=pl.BlockSpec((1, tq, C), lambda b, q: (b, q, 0)),
        ),
        compiler_params=pltpu.CompilerParams(
            dimension_semantics=("parallel", "parallel"),
            vmem_limit_bytes=_vmem_limit_bytes(vmem_cap, est2)),
    )(theta_tok, phiT, g_p, wa)

    # ---- epilogue: undo the window-token permutation; residual + sigma ----
    # (XLA fuses the elementwise add/scale into the transpose.)
    o = out_tok.reshape(B, 2, 2, H // 2, W // 2, C)
    o = jnp.transpose(o, (0, 5, 3, 1, 4, 2)).reshape(B, C, H, W)
    return x + sigma * o


def self_attention_ref(x, w_theta, w_phi, w_g, w_attn, sigma):
    """Pure-JAX f32 reference mirroring the PyTorch forward (NCHW)."""
    B, C, H, W = x.shape
    C8, C2 = C // 8, C // 2
    conv = lambda inp, w: jnp.einsum('oc,bchw->bohw', w, inp)
    theta = conv(x, w_theta).reshape(B, C8, H * W)
    phi = conv(x, w_phi).reshape(B, C8, H // 2, 2, W // 2, 2).max(axis=(3, 5))
    phi = phi.reshape(B, C8, H * W // 4)
    attn = jax.nn.softmax(jnp.einsum('bct,bcs->bts', theta, phi), axis=-1)
    g = conv(x, w_g).reshape(B, C2, H // 2, 2, W // 2, 2).max(axis=(3, 5))
    g = g.reshape(B, C2, H * W // 4)
    attn_g = jnp.einsum('bcs,bts->bct', g, attn).reshape(B, C2, H, W)
    attn_g = conv(attn_g, w_attn)
    return x + sigma * attn_g


if __name__ == "__main__":
    B, C, H, W = 2, 32, 16, 16
    key = jax.random.PRNGKey(0)
    k0, k1, k2, k3, k4 = jax.random.split(key, 5)

    x = jax.random.normal(k0, (B, C, H, W), jnp.float32)
    # Conv weights, torch layout (Cout, Cin) (kernel_size=1 squeezed), no bias.
    w_theta = 0.1 * jax.random.normal(k1, (C // 8, C), jnp.float32)
    w_phi = 0.1 * jax.random.normal(k2, (C // 8, C), jnp.float32)
    w_g = 0.1 * jax.random.normal(k3, (C // 2, C), jnp.float32)
    w_attn = 0.1 * jax.random.normal(k4, (C, C // 2), jnp.float32)
    # nn.Parameter(torch.zeros(1)) initializes sigma to 0; use a nonzero value
    # here so the attention branch actually contributes in this synthetic test.
    sigma = 0.5

    # Small tile caps so the test exercises the multi-tile (query / key) paths.
    out = self_attention_pallas(x, w_theta, w_phi, w_g, w_attn, sigma,
                                tq_max=64, tkv_max=32)
    out = jax.block_until_ready(out)

    ref = self_attention_ref(x, w_theta, w_phi, w_g, w_attn, sigma)
    assert out.shape == (B, C, H, W)
    # bf16 MXU operands + approx reciprocal => slightly looser tolerance.
    assert jnp.allclose(out, ref, atol=3e-2, rtol=3e-2), float(
        jnp.max(jnp.abs(out - ref)))
    print("KERNEL_OK")
</pallas_src>

<mosaic_0001>
module attributes {stable_mosaic.version = 11 : i64} {
  func.func @_proj_pool_kernel(%arg0: i32, %arg1: i32, %arg2: memref<1x4x32x32xbf16, #tpu.memory_space<vmem>>, %arg3: memref<32x24xbf16, #tpu.memory_space<vmem>>, %arg4: memref<1x4x32x4xbf16, #tpu.memory_space<vmem>>, %arg5: memref<1x32x4xbf16, #tpu.memory_space<vmem>>, %arg6: memref<1x32x16xbf16, #tpu.memory_space<vmem>>) attributes {dimension_semantics = [#tpu.dimension_semantics<parallel>, #tpu.dimension_semantics<parallel>], iteration_bounds = array<i64: 2, 2>, scalar_prefetch = 0 : i64, scratch_operands = 0 : i64, tpu.core_type = #tpu.core_type<tc>, window_params = [{transform_indices = @transform_0, window_bounds = array<i64: 1, 4, 32, 32>}, {pipeline_mode = #tpu.pipeline_mode<synchronous>, transform_indices = @transform_1, window_bounds = array<i64: 32, 24>}, {transform_indices = @transform_2, window_bounds = array<i64: 1, 4, 32, 4>}, {transform_indices = @transform_3, window_bounds = array<i64: 1, 32, 4>}, {transform_indices = @transform_4, window_bounds = array<i64: 1, 32, 16>}]} {
    %c0 = arith.constant 0 : index
    %c0_0 = arith.constant 0 : index
    %c0_1 = arith.constant 0 : index
    %c0_2 = arith.constant 0 : index
    %0 = vector.load %arg2[%c0, %c0_0, %c0_1, %c0_2] : memref<1x4x32x32xbf16, #tpu.memory_space<vmem>>, vector<1x4x32x32xbf16>
    %1 = vector.shape_cast %0 : vector<1x4x32x32xbf16> to vector<4x32x32xbf16>
    %2 = vector.shape_cast %1 : vector<4x32x32xbf16> to vector<128x32xbf16>
    %c0_3 = arith.constant 0 : index
    %c0_4 = arith.constant 0 : index
    %3 = vector.load %arg3[%c0_3, %c0_4] : memref<32x24xbf16, #tpu.memory_space<vmem>>, vector<32x24xbf16>
    %cst = arith.constant dense<0.000000e+00> : vector<128x24xf32>
    %4 = tpu.matmul %2, %3, %cst {dimension_numbers = #tpu.dot_dimension_numbers<[1], [0], [0], [1], [0, 0, 1, 1], [], []>} : vector<128x32xbf16>, vector<32x24xbf16>, vector<128x24xf32> -> vector<128x24xf32>
    %5 = vector.extract_strided_slice %4 {offsets = [0, 0], sizes = [128, 4], strides = [1, 1]} : vector<128x24xf32> to vector<128x4xf32>
    %6 = vector.shape_cast %5 : vector<128x4xf32> to vector<4x32x4xf32>
    %7 = arith.truncf %6 : vector<4x32x4xf32> to vector<4x32x4xbf16>
    %c0_5 = arith.constant 0 : index
    %c0_6 = arith.constant 0 : index
    %c0_7 = arith.constant 0 : index
    %c0_8 = arith.constant 0 : index
    %8 = vector.load %arg4[%c0_5, %c0_6, %c0_7, %c0_8] : memref<1x4x32x4xbf16, #tpu.memory_space<vmem>>, vector<1x4x32x4xbf16>
    %9 = vector.shape_cast %8 : vector<1x4x32x4xbf16> to vector<4x32x4xbf16>
    %10 = vector.shape_cast %7 : vector<4x32x4xbf16> to vector<1x4x32x4xbf16>
    tpu.vector_store %arg4[%c0_5, %c0_6, %c0_7, %c0_8], %10 {strides = array<i32>} : memref<1x4x32x4xbf16, #tpu.memory_space<vmem>>, vector<1x4x32x4xbf16>,
    %11 = vector.extract_strided_slice %4 {offsets = [0, 4], sizes = [128, 4], strides = [1, 1]} : vector<128x24xf32> to vector<128x4xf32>
    %12 = vector.shape_cast %11 : vector<128x4xf32> to vector<4x32x4xf32>
    %cst_9 = arith.constant dense<0xFF800000> : vector<32x4xf32>
    %13 = vector.multi_reduction <maximumf>, %12, %cst_9 [0] : vector<4x32x4xf32> to vector<32x4xf32>
    %14 = arith.truncf %13 : vector<32x4xf32> to vector<32x4xbf16>
    %c0_10 = arith.constant 0 : index
    %c0_11 = arith.constant 0 : index
    %c0_12 = arith.constant 0 : index
    %15 = vector.load %arg5[%c0_10, %c0_11, %c0_12] : memref<1x32x4xbf16, #tpu.memory_space<vmem>>, vector<1x32x4xbf16>
    %16 = vector.shape_cast %15 : vector<1x32x4xbf16> to vector<32x4xbf16>
    %17 = vector.shape_cast %14 : vector<32x4xbf16> to vector<1x32x4xbf16>
    tpu.vector_store %arg5[%c0_10, %c0_11, %c0_12], %17 {strides = array<i32>} : memref<1x32x4xbf16, #tpu.memory_space<vmem>>, vector<1x32x4xbf16>,
    %18 = vector.extract_strided_slice %4 {offsets = [0, 8], sizes = [128, 16], strides = [1, 1]} : vector<128x24xf32> to vector<128x16xf32>
    %19 = vector.shape_cast %18 : vector<128x16xf32> to vector<4x32x16xf32>
    %cst_13 = arith.constant dense<0xFF800000> : vector<32x16xf32>
    %20 = vector.multi_reduction <maximumf>, %19, %cst_13 [0] : vector<4x32x16xf32> to vector<32x16xf32>
    %21 = arith.truncf %20 : vector<32x16xf32> to vector<32x16xbf16>
    %c0_14 = arith.constant 0 : index
    %c0_15 = arith.constant 0 : index
    %c0_16 = arith.constant 0 : index
    %22 = vector.load %arg6[%c0_14, %c0_15, %c0_16] : memref<1x32x16xbf16, #tpu.memory_space<vmem>>, vector<1x32x16xbf16>
    %23 = vector.shape_cast %22 : vector<1x32x16xbf16> to vector<32x16xbf16>
    %24 = vector.shape_cast %21 : vector<32x16xbf16> to vector<1x32x16xbf16>
    tpu.vector_store %arg6[%c0_14, %c0_15, %c0_16], %24 {strides = array<i32>} : memref<1x32x16xbf16, #tpu.memory_space<vmem>>, vector<1x32x16xbf16>,
    return
  }
  func.func @transform_0(%arg0: i32, %arg1: i32) -> (i32, i32, i32, i32) {
    %c0_i32 = arith.constant 0 : i32
    %c0_i32_0 = arith.constant 0 : i32
    %c0_i32_1 = arith.constant 0 : i32
    return %arg0, %c0_i32, %arg1, %c0_i32_0 : i32, i32, i32, i32
  }
  func.func @transform_1(%arg0: i32, %arg1: i32) -> (i32, i32) {
    %c0_i32 = arith.constant 0 : i32
    %c0_i32_0 = arith.constant 0 : i32
    %c0_i32_1 = arith.constant 0 : i32
    return %c0_i32, %c0_i32_0 : i32, i32
  }
  func.func @transform_2(%arg0: i32, %arg1: i32) -> (i32, i32, i32, i32) {
    %c0_i32 = arith.constant 0 : i32
    %c0_i32_0 = arith.constant 0 : i32
    %c0_i32_1 = arith.constant 0 : i32
    return %arg0, %c0_i32, %arg1, %c0_i32_0 : i32, i32, i32, i32
  }
  func.func @transform_3(%arg0: i32, %arg1: i32) -> (i32, i32, i32) {
    %c0_i32 = arith.constant 0 : i32
    %c0_i32_0 = arith.constant 0 : i32
    return %arg0, %arg1, %c0_i32 : i32, i32, i32
  }
  func.func @transform_4(%arg0: i32, %arg1: i32) -> (i32, i32, i32) {
    %c0_i32 = arith.constant 0 : i32
    %c0_i32_0 = arith.constant 0 : i32
    return %arg0, %arg1, %c0_i32 : i32, i32, i32
  }
}

</mosaic_0001>

<llo_original>
// kernel: tpu_custom_call.1
$region0: #{tpu_custom_call.1}
  #allocation0 [shape = 'u32[]', space=smem, size = 0x4, offset = 0x4, fixed_abs, tag = 'smem constant byte address 0x4 - core index']
  #allocation1 [shape = 'u32[144,128]{1,0:T(1,128)}', space=vmem, size = 0x12000, scoped, tag = 'internal scratch']
  %s0 = inlined_call_operand.vmem [shape: bf16[2,4,64,32], index: 0, kind: input, shape index: {}]
  %s1 = inlined_call_operand.vmem [shape: bf16[32,24], index: 1, kind: input, shape index: {}]
  %s2 = inlined_call_operand.vmem [shape: bf16[2,4,64,4], index: 2, kind: output, shape index: {0}]
  %s3 = inlined_call_operand.vmem [shape: bf16[2,64,4], index: 3, kind: output, shape index: {1}]
  %s4 = inlined_call_operand.vmem [shape: bf16[2,64,16], index: 4, kind: output, shape index: {2}]
  %5 = xla_tuple %s2, %s3, %s4
  %s6 = sld [smem:[#allocation0]]
  $region135: #{tpu_custom_call.1} parent=0
    _
  %s8 = ssub.s32 1, %s6
  %s9 = scalar_select 0, %s8, %s6
  $region1: #{tpu_custom_call.1} parent=0
    #allocation2 [shape = 'u8[65536]{0}', space=vmem, size = 0x10000, scoped, tag = 'input window, operand 0']
    #allocation3 [shape = 'u8[65536]{0}', space=vmem, size = 0x10000, scoped, tag = 'output window, operand 0']
    loop: start=0, step=1, limit=6
    $region2: #{tpu_custom_call.1} parent=1 // loop_pre_header
      _
    $region3: #{tpu_custom_call.1} parent=1 // loop_header
      %s11 = sphi 0, %s15
      %p12 = scmp.ge.s32.totalorder %s11, 6
      %s18 = sphi 0, %s30
      %s19 = sphi 0, %s26
      %s20 = sphi 0, %s18
      %s21 = sphi 0, %s19
      %s22 = sphi 0, %s20
      %s23 = sphi 0, %s21
      %s35 = sphi 0, %s37
      %s38 = sphi 0, %s35
      %s39 = sphi 0, %s38
      %s55 = sphi 0, %s39
      %s59 = sphi 0, %s59
      %s61 = sphi 0, %s59
      %s62 = sphi 0, %s61
      %s76 = sphi 0, %s62
      %s84 = sphi 0, %s86
      %s87 = sphi 0, %s84
      %s88 = sphi 0, %s87
      %s104 = sphi 0, %s88
      %s112 = sphi 0, %s114
      %s115 = sphi 0, %s112
      %s116 = sphi 0, %s115
      %s132 = sphi 0, %s116
      %s140 = sphi 0, %s142
      %s143 = sphi 0, %s140
      %s144 = sphi 0, %s143
      %s160 = sphi 0, %s144
    $region4: #{tpu_custom_call.1} parent=1 // loop_header_branch
      %14 = sbr.rel (%p12) target = $region8
    $region5: #{tpu_custom_call.1} parent=1 // loop_body
      %s16 = ssub.s32 %s11, 1
      %s17 = ssub.s32 %s11, 2
      %s24 = sadd.s32 1, %s19
      %p25 = scmp.ge.s32.totalorder %s24, 2
      %s26 = scalar_select %p25, 0, %s24
      %s27 = sadd.s32 1, %s18
      %s28 = scalar_select %p25, %s27, %s18
      %p29 = scmp.ge.s32.totalorder %s28, 2
      %s30 = scalar_select %p29, 0, %s28
      %s31 = ssub.s32 %s18, %s30
      %s32 = ssub.s32 %s19, %s26
      %s33 = sor.u32 %s31, %s32
      %p34 = scmp.eq.s32.totalorder %s33, 0
      %s36 = sadd.s32 %s35, 1
      %s37 = scalar_select %p34, %s35, %s36
      %p40 = pneg %p34
      %p41 = scmp.eq.s32.totalorder %s11, 3
      %p42 = por %p40, %p41
      %p43 = scmp.ne.s32.totalorder %s35, %s38
      %p44 = scmp.eq.s32.totalorder %s11, 0
      %p45 = por %p43, %p44
      %p46 = scmp.ne.s32.totalorder %s35, %s38
      %p47 = scmp.eq.s32.totalorder %s16, 3
      %p48 = por %p46, %p47
      %p49 = scmp.ne.s32.totalorder %s38, %s39
      %p50 = scmp.eq.s32.totalorder %s16, 0
      %p51 = por %p49, %p50
      %p52 = scmp.ne.s32.totalorder %s38, %s39
      %p53 = scmp.eq.s32.totalorder %s17, 3
      %p54 = por %p52, %p53
      %p56 = scmp.ne.s32.totalorder %s39, %s55
      %p57 = scmp.eq.s32.totalorder %s17, 0
      %p58 = por %p56, %p57
      %s60 = sadd.s32 %s59, 1
      %p63 = scmp.eq.s32.totalorder %s11, 3
      %p64 = scmp.ne.s32.totalorder %s59, %s61
      %p65 = scmp.eq.s32.totalorder %s11, 0
      %p66 = por %p64, %p65
      %p67 = scmp.ne.s32.totalorder %s59, %s61
      %p68 = scmp.eq.s32.totalorder %s16, 3
      %p69 = por %p67, %p68
      %p70 = scmp.ne.s32.totalorder %s61, %s62
      %p71 = scmp.eq.s32.totalorder %s16, 0
      %p72 = por %p70, %p71
      %p73 = scmp.ne.s32.totalorder %s61, %s62
      %p74 = scmp.eq.s32.totalorder %s17, 3
      %p75 = por %p73, %p74
      %p77 = scmp.ne.s32.totalorder %s62, %s76
      %p78 = scmp.eq.s32.totalorder %s17, 0
      %p79 = por %p77, %p78
      %s80 = ssub.s32 %s18, %s30
      %s81 = ssub.s32 %s19, %s26
      %s82 = sor.u32 %s80, %s81
      %p83 = scmp.eq.s32.totalorder %s82, 0
      %s85 = sadd.s32 %s84, 1
      %s86 = scalar_select %p83, %s84, %s85
      %p89 = pneg %p83
      %p90 = scmp.eq.s32.totalorder %s11, 3
      %p91 = por %p89, %p90
      %p92 = scmp.ne.s32.totalorder %s84, %s87
      %p93 = scmp.eq.s32.totalorder %s11, 0
      %p94 = por %p92, %p93
      %p95 = scmp.ne.s32.totalorder %s84, %s87
      %p96 = scmp.eq.s32.totalorder %s16, 3
      %p97 = por %p95, %p96
      %p98 = scmp.ne.s32.totalorder %s87, %s88
      %p99 = scmp.eq.s32.totalorder %s16, 0
      %p100 = por %p98, %p99
      %p101 = scmp.ne.s32.totalorder %s87, %s88
      %p102 = scmp.eq.s32.totalorder %s17, 3
      %p103 = por %p101, %p102
      %p105 = scmp.ne.s32.totalorder %s88, %s104
      %p106 = scmp.eq.s32.totalorder %s17, 0
      %p107 = por %p105, %p106
      %s108 = ssub.s32 %s18, %s30
      %s109 = ssub.s32 %s19, %s26
      %s110 = sor.u32 %s108, %s109
      %p111 = scmp.eq.s32.totalorder %s110, 0
      %s113 = sadd.s32 %s112, 1
      %s114 = scalar_select %p111, %s112, %s113
      %p117 = pneg %p111
      %p118 = scmp.eq.s32.totalorder %s11, 3
      %p119 = por %p117, %p118
      %p120 = scmp.ne.s32.totalorder %s112, %s115
      %p121 = scmp.eq.s32.totalorder %s11, 0
      %p122 = por %p120, %p121
      %p123 = scmp.ne.s32.totalorder %s112, %s115
      %p124 = scmp.eq.s32.totalorder %s16, 3
      %p125 = por %p123, %p124
      %p126 = scmp.ne.s32.totalorder %s115, %s116
      %p127 = scmp.eq.s32.totalorder %s16, 0
      %p128 = por %p126, %p127
      %p129 = scmp.ne.s32.totalorder %s115, %s116
      %p130 = scmp.eq.s32.totalorder %s17, 3
      %p131 = por %p129, %p130
      %p133 = scmp.ne.s32.totalorder %s116, %s132
      %p134 = scmp.eq.s32.totalorder %s17, 0
      %p135 = por %p133, %p134
      %s136 = ssub.s32 %s18, %s30
      %s137 = ssub.s32 %s19, %s26
      %s138 = sor.u32 %s136, %s137
      %p139 = scmp.eq.s32.totalorder %s138, 0
      %s141 = sadd.s32 %s140, 1
      %s142 = scalar_select %p139, %s140, %s141
      %p145 = pneg %p139
      %p146 = scmp.eq.s32.totalorder %s11, 3
      %p147 = por %p145, %p146
      %p148 = scmp.ne.s32.totalorder %s140, %s143
      %p149 = scmp.eq.s32.totalorder %s11, 0
      %p150 = por %p148, %p149
      %p151 = scmp.ne.s32.totalorder %s140, %s143
      %p152 = scmp.eq.s32.totalorder %s16, 3
      %p153 = por %p151, %p152
      %p154 = scmp.ne.s32.totalorder %s143, %s144
      %p155 = scmp.eq.s32.totalorder %s16, 0
      %p156 = por %p154, %p155
      %p157 = scmp.ne.s32.totalorder %s143, %s144
      %p158 = scmp.eq.s32.totalorder %s17, 3
      %p159 = por %p157, %p158
      %p161 = scmp.ne.s32.totalorder %s144, %s160
      %p162 = scmp.eq.s32.totalorder %s17, 0
      %p163 = por %p161, %p162
      %p164 = scmp.le.s32.totalorder 1, %s11
      %p165 = scmp.lt.s32.totalorder %s11, 5
      %p166 = pnand %p164, %p165
      %p167 = pneg %p166
      // Predicated region
      $region9: #{tpu_custom_call.1} parent=5 // pred_check
        _
      $region10: #{tpu_custom_call.1} parent=5 // pred_check_branch
        %169 = sbr.rel (%p166) target = $region12
      $region11: #{tpu_custom_call.1} parent=5 // pred_region
        %s170 = ssub.s32 %s11, 1
        // Predicated region
        $region13: #{tpu_custom_call.1} parent=11 // pred_check
          %p171 = pneg %p72
        $region14: #{tpu_custom_call.1} parent=11 // pred_check_branch
          %173 = sbr.rel (%p171) target = $region16
        $region15: #{tpu_custom_call.1} parent=11 // pred_region
          _
        $region16: #{tpu_custom_call.1} parent=11 // pred_fallthru
          _
      $region12: #{tpu_custom_call.1} parent=5 // pred_fallthru
        _
      %p174 = scmp.lt.s32.totalorder %s11, 4
      // Predicated region
      $region17: #{tpu_custom_call.1} parent=5 // pred_check
        %p175 = pneg %p174
      $region18: #{tpu_custom_call.1} parent=5 // pred_check_branch
        %177 = sbr.rel (%p175) target = $region20
      $region19: #{tpu_custom_call.1} parent=5 // pred_region
        // Predicated region
        $region21: #{tpu_custom_call.1} parent=19 // pred_check
          %p178 = pneg %p45
        $region22: #{tpu_custom_call.1} parent=19 // pred_check_branch
          %180 = sbr.rel (%p178) target = $region24
        $region23: #{tpu_custom_call.1} parent=19 // pred_region
          %s181 = sand.u32 %s35, 1
          %s182 = sand.u32 %s35, 1
          %s183 = smul.addr %s182, 64
          %s184 = scalar_lea.vmem [#allocation2], %s183
          %s185 = smul.u32 4, %s19
          %s186 = smul.addr %s18, 32
          %s187 = sadd.s32 %s185, %s186
          %s188 = smul.addr %s187, 4
          %s189 = scalar_lea.vmem %s0, %s188
          // Predicated region
          $region25: #{tpu_custom_call.1} parent=23 // pred_check
            _
          $region26: #{tpu_custom_call.1} parent=23 // pred_check_branch
            %191 = sbr.rel (0) target = $region28
          $region27: #{tpu_custom_call.1} parent=23 // pred_region
            // Predicated region
            $region29: #{tpu_custom_call.1} parent=27 // pred_check
              _
            $region30: #{tpu_custom_call.1} parent=27 // pred_check_branch
              %193 = sbr.rel target = $region32
            $region31: #{tpu_custom_call.1} parent=27 // pred_region
              // Predicated region
              $region44: #{tpu_custom_call.1} parent=31 // pred_check
                _
              $region45: #{tpu_custom_call.1} parent=31 // pred_check_branch
                %238 = sbr.rel (0) target = $region47
              $region46: #{tpu_custom_call.1} parent=31 // pred_region
                loop: start=0, step=1, limit=1
                $region48: #{tpu_custom_call.1} parent=46 // loop_pre_header
                  _
                $region49: #{tpu_custom_call.1} parent=46 // loop_header
                  %s240 = sphi 0, %s244
                  %p241 = scmp.ge.s32.totalorder %s240, 1
                  %s245 = sphi %s189, %s189
                  %s246 = sphi %s184, %s184
                $region50: #{tpu_custom_call.1} parent=46 // loop_header_branch
                  %243 = sbr.rel (%p241) target = $region54
                $region51: #{tpu_custom_call.1} parent=46 // loop_body
                  _
                $region52: #{tpu_custom_call.1} parent=46 // loop_footer
                  %s244 = sadd.s32 1, %s240
                $region53: #{tpu_custom_call.1} parent=46 // loop_footer_branch
                  %239 = sbr.rel target = $region49
                $region54: #{tpu_custom_call.1} parent=46 // loop_exit
                  _
                loop: start=0, step=1, limit=1
                $region55: #{tpu_custom_call.1} parent=46 // loop_pre_header
                  _
                $region56: #{tpu_custom_call.1} parent=46 // loop_header
                  %s249 = sphi 0, %s253
                  %p250 = scmp.ge.s32.totalorder %s249, 1
                  %s254 = sphi %s189, %s189
                  %s255 = sphi %s184, %s184
                $region57: #{tpu_custom_call.1} parent=46 // loop_header_branch
                  %252 = sbr.rel (%p250) target = $region61
                $region58: #{tpu_custom_call.1} parent=46 // loop_body
                  %v256 = vld [vmem:[%s254] sm:$0xf]
                  %257 = vst [vmem:[%s255] sm:$0xf] %v256
                  %v258 = vld [vmem:[%s254 + $0x4] sm:$0xf]
                  %259 = vst [vmem:[%s255 + $0x4] sm:$0xf] %v258
                  %v260 = vld [vmem:[%s254 + $0x8] sm:$0xf]
                  %261 = vst [vmem:[%s255 + $0x8] sm:$0xf] %v260
                  %v262 = vld [vmem:[%s254 + $0xc] sm:$0xf]
                  %263 = vst [vmem:[%s255 + $0xc] sm:$0xf] %v262
                  %v264 = vld [vmem:[%s254 + $0x20] sm:$0xf]
                  %265 = vst [vmem:[%s255 + $0x10] sm:$0xf] %v264
                  %v266 = vld [vmem:[%s254 + $0x24] sm:$0xf]
                  %267 = vst [vmem:[%s255 + $0x14] sm:$0xf] %v266
                  %v268 = vld [vmem:[%s254 + $0x28] sm:$0xf]
                  %269 = vst [vmem:[%s255 + $0x18] sm:$0xf] %v268
                  %v270 = vld [vmem:[%s254 + $0x2c] sm:$0xf]
                  %271 = vst [vmem:[%s255 + $0x1c] sm:$0xf] %v270
                  %v272 = vld [vmem:[%s254 + $0x40] sm:$0xf]
                  %273 = vst [vmem:[%s255 + $0x20] sm:$0xf] %v272
                  %v274 = vld [vmem:[%s254 + $0x44] sm:$0xf]
                  %275 = vst [vmem:[%s255 + $0x24] sm:$0xf] %v274
                  %v276 = vld [vmem:[%s254 + $0x48] sm:$0xf]
                  %277 = vst [vmem:[%s255 + $0x28] sm:$0xf] %v276
                  %v278 = vld [vmem:[%s254 + $0x4c] sm:$0xf]
                  %279 = vst [vmem:[%s255 + $0x2c] sm:$0xf] %v278
                  %v280 = vld [vmem:[%s254 + $0x60] sm:$0xf]
                  %281 = vst [vmem:[%s255 + $0x30] sm:$0xf] %v280
                  %v282 = vld [vmem:[%s254 + $0x64] sm:$0xf]
                  %283 = vst [vmem:[%s255 + $0x34] sm:$0xf] %v282
                  %v284 = vld [vmem:[%s254 + $0x68] sm:$0xf]
                  %285 = vst [vmem:[%s255 + $0x38] sm:$0xf] %v284
                  %v286 = vld [vmem:[%s254 + $0x6c] sm:$0xf]
                  %287 = vst [vmem:[%s255 + $0x3c] sm:$0xf] %v286
                $region59: #{tpu_custom_call.1} parent=46 // loop_footer
                  %s253 = sadd.s32 1, %s249
                $region60: #{tpu_custom_call.1} parent=46 // loop_footer_branch
                  %248 = sbr.rel target = $region56
                $region61: #{tpu_custom_call.1} parent=46 // loop_exit
                  _
              $region47: #{tpu_custom_call.1} parent=31 // pred_fallthru
                _
            $region32: #{tpu_custom_call.1} parent=27 // pred_fallthru
              _
            // Predicated region
            $region33: #{tpu_custom_call.1} parent=27 // pred_check
              _
            $region34: #{tpu_custom_call.1} parent=27 // pred_check_branch
              %195 = sbr.rel (0) target = $region36
            $region35: #{tpu_custom_call.1} parent=27 // pred_region
              loop: start=0, step=1, limit=1
              $region37: #{tpu_custom_call.1} parent=35 // loop_pre_header
                _
              $region38: #{tpu_custom_call.1} parent=35 // loop_header
                %s198 = sphi 0, %s202
                %p199 = scmp.ge.s32.totalorder %s198, 1
                %s203 = sphi %s189, %s189
                %s204 = sphi %s184, %s184
              $region39: #{tpu_custom_call.1} parent=35 // loop_header_branch
                %201 = sbr.rel (%p199) target = $region43
              $region40: #{tpu_custom_call.1} parent=35 // loop_body
                %v205 = vld [vmem:[%s203] sm:$0xf]
                %206 = vst [vmem:[%s204] sm:$0xf] %v205
                %v207 = vld [vmem:[%s203 + $0x4] sm:$0xf]
                %208 = vst [vmem:[%s204 + $0x4] sm:$0xf] %v207
                %v209 = vld [vmem:[%s203 + $0x8] sm:$0xf]
                %210 = vst [vmem:[%s204 + $0x8] sm:$0xf] %v209
                %v211 = vld [vmem:[%s203 + $0xc] sm:$0xf]
                %212 = vst [vmem:[%s204 + $0xc] sm:$0xf] %v211
                %v213 = vld [vmem:[%s203 + $0x20] sm:$0xf]
                %214 = vst [vmem:[%s204 + $0x10] sm:$0xf] %v213
                %v215 = vld [vmem:[%s203 + $0x24] sm:$0xf]
                %216 = vst [vmem:[%s204 + $0x14] sm:$0xf] %v215
                %v217 = vld [vmem:[%s203 + $0x28] sm:$0xf]
                %218 = vst [vmem:[%s204 + $0x18] sm:$0xf] %v217
                %v219 = vld [vmem:[%s203 + $0x2c] sm:$0xf]
                %220 = vst [vmem:[%s204 + $0x1c] sm:$0xf] %v219
                %v221 = vld [vmem:[%s203 + $0x40] sm:$0xf]
                %222 = vst [vmem:[%s204 + $0x20] sm:$0xf] %v221
                %v223 = vld [vmem:[%s203 + $0x44] sm:$0xf]
                %224 = vst [vmem:[%s204 + $0x24] sm:$0xf] %v223
                %v225 = vld [vmem:[%s203 + $0x48] sm:$0xf]
                %226 = vst [vmem:[%s204 + $0x28] sm:$0xf] %v225
                %v227 = vld [vmem:[%s203 + $0x4c] sm:$0xf]
                %228 = vst [vmem:[%s204 + $0x2c] sm:$0xf] %v227
                %v229 = vld [vmem:[%s203 + $0x60] sm:$0xf]
                %230 = vst [vmem:[%s204 + $0x30] sm:$0xf] %v229
                %v231 = vld [vmem:[%s203 + $0x64] sm:$0xf]
                %232 = vst [vmem:[%s204 + $0x34] sm:$0xf] %v231
                %v233 = vld [vmem:[%s203 + $0x68] sm:$0xf]
                %234 = vst [vmem:[%s204 + $0x38] sm:$0xf] %v233
                %v235 = vld [vmem:[%s203 + $0x6c] sm:$0xf]
                %236 = vst [vmem:[%s204 + $0x3c] sm:$0xf] %v235
              $region41: #{tpu_custom_call.1} parent=35 // loop_footer
                %s202 = sadd.s32 1, %s198
              $region42: #{tpu_custom_call.1} parent=35 // loop_footer_branch
                %197 = sbr.rel target = $region38
              $region43: #{tpu_custom_call.1} parent=35 // loop_exit
                _
            $region36: #{tpu_custom_call.1} parent=27 // pred_fallthru
              _
          $region28: #{tpu_custom_call.1} parent=23 // pred_fallthru
            _
          %288 = vnop
        $region24: #{tpu_custom_call.1} parent=19 // pred_fallthru
          _
      $region20: #{tpu_custom_call.1} parent=5 // pred_fallthru
        _
      %p289 = scmp.le.s32.totalorder 1, %s11
      %p290 = scmp.lt.s32.totalorder %s11, 5
      %p291 = pnand %p289, %p290
      %p292 = pneg %p291
      // Predicated region
      $region62: #{tpu_custom_call.1} parent=5 // pred_check
        _
      $region63: #{tpu_custom_call.1} parent=5 // pred_check_branch
        %294 = sbr.rel (%p291) target = $region65
      $region64: #{tpu_custom_call.1} parent=5 // pred_region
        %s295 = ssub.s32 %s11, 1
        %s296 = sand.u32 %s38, 1
        %s297 = sand.u32 %s38, 1
        %s298 = smul.addr %s297, 64
        %s299 = scalar_lea.vmem [#allocation2], %s298
        // Predicated region
        $region66: #{tpu_custom_call.1} parent=64 // pred_check
          %p300 = pneg %p51
        $region67: #{tpu_custom_call.1} parent=64 // pred_check_branch
          %302 = sbr.rel (%p300) target = $region69
        $region68: #{tpu_custom_call.1} parent=64 // pred_region
          _
        $region69: #{tpu_custom_call.1} parent=64 // pred_fallthru
          _
        %s303 = sand.u32 %s38, 1
        %s304 = sand.u32 %s38, 1
        %s305 = smul.addr %s304, 64
        %s306 = scalar_lea.vmem [#allocation2], %s305
        %p307 = pneg %p51
        %p308 = pneg %p48
        %p309 = pneg %p72
        %p310 = pneg %p69
        %p311 = pneg %p100
        %p312 = pneg %p97
        %s313 = sand.u32 %s87, 1
        %s314 = sand.u32 %s87, 1
        %s315 = smul.addr %s314, 64
        %s316 = scalar_lea.vmem [#allocation3], %s315
        %p317 = pneg %p128
        %p318 = pneg %p125
        %s319 = smul.u32 4, %s21
        %p320 = scmp.lt.s32.totalorder %s20, 1
        %s321 = scalar_select %p320, %s20, 1
        %p322 = scmp.lt.s32.totalorder %s319, 7
        %s323 = scalar_select %p322, %s319, 7
        %s324 = smul.addr %s321, 8
        %s325 = sadd.s32 %s323, %s324
        %s326 = smul.addr %s325, 4
        %s327 = scalar_lea.vmem %s3, %s326
        %p328 = pneg %p156
        %p329 = pneg %p153
        %s330 = smul.u32 4, %s21
        %p331 = scmp.lt.s32.totalorder %s20, 1
        %s332 = scalar_select %p331, %s20, 1
        %p333 = scmp.lt.s32.totalorder %s330, 7
        %s334 = scalar_select %p333, %s330, 7
        %s335 = smul.addr %s332, 8
        %s336 = sadd.s32 %s334, %s335
        %s337 = smul.addr %s336, 4
        %s338 = scalar_lea.vmem %s4, %s337
        %s339 = smul.u32 4, %s21
        %s340 = smul.u32 4, %s21
        %s341 = smul.u32 4, %s21
        %p342 = scmp.lt.s32.totalorder %s20, 1
        %s343 = scalar_select %p342, %s20, 1
        %p344 = scmp.lt.s32.totalorder %s341, 7
        %s345 = scalar_select %p344, %s341, 7
        %s346 = smul.addr %s343, 8
        %s347 = sadd.s32 %s345, %s346
        %s348 = smul.addr %s347, 4
        %s349 = scalar_lea.vmem %s3, %s348
        %s350 = smul.u32 4, %s21
        %s351 = smul.u32 4, %s21
        %p352 = scmp.lt.s32.totalorder %s20, 1
        %s353 = scalar_select %p352, %s20, 1
        %p354 = scmp.lt.s32.totalorder %s351, 7
        %s355 = scalar_select %p354, %s351, 7
        %s356 = smul.addr %s353, 8
        %s357 = sadd.s32 %s355, %s356
        %s358 = smul.addr %s357, 4
        %s359 = scalar_lea.vmem %s4, %s358
        %s360 = smul.u32 4, %s21
        %v362 = vld [vmem:[%s299] sm:$0xf]
        %v363 = vld [vmem:[%s299 + $0x4] sm:$0xf]
        %v364 = vld [vmem:[%s299 + $0x8] sm:$0xf]
        %v365 = vld [vmem:[%s299 + $0xc] sm:$0xf]
        %v366 = vld [vmem:[%s299 + $0x10] sm:$0xf]
        %v367 = vld [vmem:[%s299 + $0x14] sm:$0xf]
        %v368 = vld [vmem:[%s299 + $0x18] sm:$0xf]
        %v369 = vld [vmem:[%s299 + $0x1c] sm:$0xf]
        %v370 = vld [vmem:[%s299 + $0x20] sm:$0xf]
        %v371 = vld [vmem:[%s299 + $0x24] sm:$0xf]
        %v372 = vld [vmem:[%s299 + $0x28] sm:$0xf]
        %v373 = vld [vmem:[%s299 + $0x2c] sm:$0xf]
        %v374 = vld [vmem:[%s299 + $0x30] sm:$0xf]
        %v375 = vld [vmem:[%s299 + $0x34] sm:$0xf]
        %v376 = vld [vmem:[%s299 + $0x38] sm:$0xf]
        %v377 = vld [vmem:[%s299 + $0x3c] sm:$0xf]
        %v378 = vld [vmem:[%s1] sm:$0xf]
        %v379 = vld [vmem:[%s1 + $0x4] sm:$0xf]
        %v380 = vld [vmem:[%s1 + $0x8] sm:$0xf]
        %v381 = vld [vmem:[%s1 + $0xc] sm:$0xf]
        %v398 = vunpack.c.l.b16 %v362
        %v399 = vunpack.c.l.b16 %v363
        %v400 = vunpack.c.l.b16 %v364
        %v401 = vunpack.c.l.b16 %v365
        %v402 = vunpack.c.l.b16 %v366
        %v403 = vunpack.c.l.b16 %v367
        %v404 = vunpack.c.l.b16 %v368
        %v405 = vunpack.c.l.b16 %v369
        %v406 = vunpack.c.l.b16 %v370
        %v407 = vunpack.c.l.b16 %v371
        %v408 = vunpack.c.l.b16 %v372
        %v409 = vunpack.c.l.b16 %v373
        %v410 = vunpack.c.l.b16 %v374
        %v411 = vunpack.c.l.b16 %v375
        %v412 = vunpack.c.l.b16 %v376
        %v413 = vunpack.c.l.b16 %v377
        %v414 = vpack.c.b16 %v399, %v398
        %v415 = vpack.c.b16 %v401, %v400
        %v416 = vpack.c.b16 %v403, %v402
        %v417 = vpack.c.b16 %v405, %v404
        %v418 = vpack.c.b16 %v407, %v406
        %v419 = vpack.c.b16 %v409, %v408
        %v420 = vpack.c.b16 %v411, %v410
        %v421 = vpack.c.b16 %v413, %v412
        %v426 = vunpack.c.l.b16 %v378
        %v427 = vunpack.c.l.b16 %v379
        %v428 = vunpack.c.l.b16 %v380
        %v429 = vunpack.c.l.b16 %v381
        %v430 = vpack.c.b16 %v427, %v426
        %v431 = vpack.c.b16 %v429, %v428
        %vm434 = vcmask 261120
        %v436 = vsel %vm434, %v414, 0
        %v439 = vsel %vm434, %v415, 0
        %v442 = vsel %vm434, %v416, 0
        %v445 = vsel %vm434, %v417, 0
        %v448 = vsel %vm434, %v418, 0
        %v451 = vsel %vm434, %v419, 0
        %v454 = vsel %vm434, %v420, 0
        %v457 = vsel %vm434, %v421, 0
        %459 = vmatprep.subr.bf16.mxu0 0
        %460 = vmatpush1.bf16.msra.mxu0 %v430
        %461 = vmatprep.subr.bf16.mxu0 0
        %462 = vmatpush1.bf16.msra.mxu0 %v431
        %463 = vmatprep.subr.bf16.mxu0 0
        %464 = vmatpush1.bf16.msra.mxu0 0
        %465 = vmatprep.subr.bf16.mxu0 0
        %466 = vmatpush1.bf16.msra.mxu0 0
        %467 = vmatprep.subr.bf16.mxu0 0
        %468 = vmatpush1.bf16.msra.mxu0 0
        %469 = vmatprep.subr.bf16.mxu0 0
        %470 = vmatpush1.bf16.msra.mxu0 0
        %471 = vmatprep.subr.bf16.mxu0 0
        %472 = vmatpush1.bf16.msra.mxu0 0
        %473 = vmatprep.subr.bf16.mxu0 0
        %474 = vmatpush1.bf16.msra.mxu0 0
        %475 = vmatprep.subr.bf16.mxu0 0
        %476 = vmatpush1.bf16.msra.mxu0 0
        %477 = vmatprep.subr.bf16.mxu0 0
        %478 = vmatpush1.bf16.msra.mxu0 0
        %479 = vmatprep.subr.bf16.mxu0 0
        %480 = vmatpush1.bf16.msra.mxu0 0
        %481 = vmatprep.subr.bf16.mxu0 0
        %482 = vmatpush1.bf16.msra.mxu0 0
        %483 = vmatprep.subr.bf16.mxu0 0
        %484 = vmatpush1.bf16.msra.mxu0 0
        %485 = vmatprep.subr.bf16.mxu0 0
        %486 = vmatpush1.bf16.msra.mxu0 0
        %487 = vmatprep.subr.bf16.mxu0 0
        %488 = vmatpush1.bf16.msra.mxu0 0
        %489 = vmatprep.subr.bf16.mxu0 0
        %490 = vmatpush1.bf16.msra.mxu0 0
        %491 = vmatprep.mubr.bf16.mxu0 0
        %492 = vmatmul.mubr.bf16.gmra.mrb[0].mxu0 %v436
        %v493 = vpop.f32.mrb[0].mxu0
        %v494 = vadd.f32 0.0, %v493
        %v495 = vpop.f32.mrb[0].mxu0
        %v496 = vpop.f32.mrb[0].mxu0
        %v497 = vadd.f32 0.0, %v496
        %v498 = vpop.f32.mrb[0].mxu0
        %499 = vmatprep.mubr.bf16.mxu0 0
        %500 = vmatmul.mubr.bf16.gmra.mrb[0].mxu0 %v439
        %v501 = vpop.f32.mrb[0].mxu0
        %v502 = vadd.f32 0.0, %v501
        %v503 = vpop.f32.mrb[0].mxu0
        %v504 = vpop.f32.mrb[0].mxu0
        %v505 = vadd.f32 0.0, %v504
        %v506 = vpop.f32.mrb[0].mxu0
        %507 = vmatprep.mubr.bf16.mxu0 0
        %508 = vmatmul.mubr.bf16.gmra.mrb[0].mxu0 %v442
        %v509 = vpop.f32.mrb[0].mxu0
        %v510 = vadd.f32 0.0, %v509
        %v511 = vpop.f32.mrb[0].mxu0
        %v512 = vpop.f32.mrb[0].mxu0
        %v513 = vadd.f32 0.0, %v512
        %v514 = vpop.f32.mrb[0].mxu0
        %515 = vmatprep.mubr.bf16.mxu0 0
        %516 = vmatmul.mubr.bf16.gmra.mrb[0].mxu0 %v445
        %v517 = vpop.f32.mrb[0].mxu0
        %v518 = vadd.f32 0.0, %v517
        %v519 = vpop.f32.mrb[0].mxu0
        %v520 = vpop.f32.mrb[0].mxu0
        %v521 = vadd.f32 0.0, %v520
        %v522 = vpop.f32.mrb[0].mxu0
        %523 = vmatprep.mubr.bf16.mxu0 0
        %524 = vmatmul.mubr.bf16.gmra.mrb[0].mxu0 %v448
        %v525 = vpop.f32.mrb[0].mxu0
        %v526 = vadd.f32 0.0, %v525
        %v527 = vpop.f32.mrb[0].mxu0
        %v528 = vpop.f32.mrb[0].mxu0
        %v529 = vadd.f32 0.0, %v528
        %v530 = vpop.f32.mrb[0].mxu0
        %531 = vmatprep.mubr.bf16.mxu0 0
        %532 = vmatmul.mubr.bf16.gmra.mrb[0].mxu0 %v451
        %v533 = vpop.f32.mrb[0].mxu0
        %v534 = vadd.f32 0.0, %v533
        %v535 = vpop.f32.mrb[0].mxu0
        %v536 = vpop.f32.mrb[0].mxu0
        %v537 = vadd.f32 0.0, %v536
        %v538 = vpop.f32.mrb[0].mxu0
        %539 = vmatprep.mubr.bf16.mxu0 0
        %540 = vmatmul.mubr.bf16.gmra.mrb[0].mxu0 %v454
        %v541 = vpop.f32.mrb[0].mxu0
        %v542 = vadd.f32 0.0, %v541
        %v543 = vpop.f32.mrb[0].mxu0
        %v544 = vpop.f32.mrb[0].mxu0
        %v545 = vadd.f32 0.0, %v544
        %v546 = vpop.f32.mrb[0].mxu0
        %547 = vmatprep.mubr.bf16.mxu0 0
        %548 = vmatmul.mubr.bf16.gmra.mrb[0].mxu0 %v457
        %v549 = vpop.f32.mrb[0].mxu0
        %v550 = vadd.f32 0.0, %v549
        %v551 = vpop.f32.mrb[0].mxu0
        %v552 = vpop.f32.mrb[0].mxu0
        %v553 = vadd.f32 0.0, %v552
        %v554 = vpop.f32.mrb[0].mxu0
        %555 = vdwg.mxu0
        %v556 = vpack.c.bf16 %v497, %v494
        %v557 = vpack.c.bf16 %v505, %v502
        %v558 = vpack.c.bf16 %v513, %v510
        %v559 = vpack.c.bf16 %v521, %v518
        %v560 = vpack.c.bf16 %v529, %v526
        %v561 = vpack.c.bf16 %v537, %v534
        %v562 = vpack.c.bf16 %v545, %v542
        %v563 = vpack.c.bf16 %v553, %v550
        %v572 = vunpack.c.l.b16 %v556
        %v573 = vunpack.c.h.b16 %v556
        %v574 = vunpack.c.l.b16 %v557
        %v575 = vunpack.c.h.b16 %v557
        %v576 = vunpack.c.l.b16 %v558
        %v577 = vunpack.c.h.b16 %v558
        %v578 = vunpack.c.l.b16 %v559
        %v579 = vunpack.c.h.b16 %v559
        %v580 = vunpack.c.l.b16 %v560
        %v581 = vunpack.c.h.b16 %v560
        %v582 = vunpack.c.l.b16 %v561
        %v583 = vunpack.c.h.b16 %v561
        %v584 = vunpack.c.l.b16 %v562
        %v585 = vunpack.c.h.b16 %v562
        %v586 = vunpack.c.l.b16 %v563
        %v587 = vunpack.c.h.b16 %v563
        %v588 = vpack.c.b16 %v572, %v572
        %v589 = vpack.c.b16 %v573, %v573
        %v590 = vpack.c.b16 %v574, %v574
        %v591 = vpack.c.b16 %v575, %v575
        %v592 = vpack.c.b16 %v576, %v576
        %v593 = vpack.c.b16 %v577, %v577
        %v594 = vpack.c.b16 %v578, %v578
        %v595 = vpack.c.b16 %v579, %v579
        %v596 = vpack.c.b16 %v580, %v580
        %v597 = vpack.c.b16 %v581, %v581
        %v598 = vpack.c.b16 %v582, %v582
        %v599 = vpack.c.b16 %v583, %v583
        %v600 = vpack.c.b16 %v584, %v584
        %v601 = vpack.c.b16 %v585, %v585
        %v602 = vpack.c.b16 %v586, %v586
        %v603 = vpack.c.b16 %v587, %v587
        %vm620 = vcmask 27648
        %621 = vst.msk [vmem:[%s316] sm:$0xf] %vm620, %v588
        %622 = vst.msk [vmem:[%s316 + $0x4] sm:$0xf] %vm620, %v589
        %623 = vst.msk [vmem:[%s316 + $0x8] sm:$0xf] %vm620, %v590
        %624 = vst.msk [vmem:[%s316 + $0xc] sm:$0xf] %vm620, %v591
        %625 = vst.msk [vmem:[%s316 + $0x10] sm:$0xf] %vm620, %v592
        %626 = vst.msk [vmem:[%s316 + $0x14] sm:$0xf] %vm620, %v593
        %627 = vst.msk [vmem:[%s316 + $0x18] sm:$0xf] %vm620, %v594
        %628 = vst.msk [vmem:[%s316 + $0x1c] sm:$0xf] %vm620, %v595
        %629 = vst.msk [vmem:[%s316 + $0x20] sm:$0xf] %vm620, %v596
        %630 = vst.msk [vmem:[%s316 + $0x24] sm:$0xf] %vm620, %v597
        %631 = vst.msk [vmem:[%s316 + $0x28] sm:$0xf] %vm620, %v598
        %632 = vst.msk [vmem:[%s316 + $0x2c] sm:$0xf] %vm620, %v599
        %633 = vst.msk [vmem:[%s316 + $0x30] sm:$0xf] %vm620, %v600
        %634 = vst.msk [vmem:[%s316 + $0x34] sm:$0xf] %vm620, %v601
        %635 = vst.msk [vmem:[%s316 + $0x38] sm:$0xf] %vm620, %v602
        %636 = vst.msk [vmem:[%s316 + $0x3c] sm:$0xf] %vm620, %v603
        %vm637 = vcmask 64544
        %v638 = vsel %vm637, %v494, -inf
        %v639 = vsel %vm637, %v510, -inf
        %v640 = vmax.f32 %v638, %v639
        %v641 = vsel %vm637, %v526, -inf
        %v642 = vmax.f32 %v640, %v641
        %v643 = vsel %vm637, %v542, -inf
        %v644 = vmax.f32 %v642, %v643
        %v645 = vsel %vm637, %v497, -inf
        %v646 = vsel %vm637, %v513, -inf
        %v647 = vmax.f32 %v645, %v646
        %v648 = vsel %vm637, %v529, -inf
        %v649 = vmax.f32 %v647, %v648
        %v650 = vsel %vm637, %v545, -inf
        %v651 = vmax.f32 %v649, %v650
        %v652 = vsel %vm637, %v502, -inf
        %v653 = vsel %vm637, %v518, -inf
        %v654 = vmax.f32 %v652, %v653
        %v655 = vsel %vm637, %v534, -inf
        %v656 = vmax.f32 %v654, %v655
        %v657 = vsel %vm637, %v550, -inf
        %v658 = vmax.f32 %v656, %v657
        %v659 = vsel %vm637, %v505, -inf
        %v660 = vsel %vm637, %v521, -inf
        %v661 = vmax.f32 %v659, %v660
        %v662 = vsel %vm637, %v537, -inf
        %v663 = vmax.f32 %v661, %v662
        %v664 = vsel %vm637, %v553, -inf
        %v665 = vmax.f32 %v663, %v664
        %v666 = vpack.c.bf16 %v651, %v644
        %v667 = vpack.c.bf16 %v665, %v658
        %v670 = vunpack.c.l.b16 %v666
        %v671 = vunpack.c.h.b16 %v666
        %v672 = vunpack.c.l.b16 %v667
        %v673 = vunpack.c.h.b16 %v667
        %v674 = vpack.c.b16 %v670, %v670
        %v675 = vpack.c.b16 %v671, %v671
        %v676 = vpack.c.b16 %v672, %v672
        %v677 = vpack.c.b16 %v673, %v673
        %678 = vrot.lane.b32.xlu0 %v674, 124
        %v679 = vpop.permute.xlu0 %678
        %680 = vrot.lane.b32.xlu0 %v675, 124
        %v681 = vpop.permute.xlu0 %680
        %682 = vrot.lane.b32.xlu0 %v676, 124
        %v683 = vpop.permute.xlu0 %682
        %684 = vrot.lane.b32.xlu0 %v677, 124
        %v685 = vpop.permute.xlu0 %684
        %690 = vst.msk [vmem:[%s349] sm:$0xf] %vm620, %v679
        %691 = vst.msk [vmem:[%s349 + $0x4] sm:$0xf] %vm620, %v681
        %692 = vst.msk [vmem:[%s349 + $0x8] sm:$0xf] %vm620, %v683
        %693 = vst.msk [vmem:[%s349 + $0xc] sm:$0xf] %vm620, %v685
        %vm694 = vcmask 195648
        %v695 = vsel %vm694, %v494, -inf
        %v696 = vsel %vm694, %v510, -inf
        %v697 = vmax.f32 %v695, %v696
        %v698 = vsel %vm694, %v526, -inf
        %v699 = vmax.f32 %v697, %v698
        %v700 = vsel %vm694, %v542, -inf
        %v701 = vmax.f32 %v699, %v700
        %v702 = vsel %vm694, %v497, -inf
        %v703 = vsel %vm694, %v513, -inf
        %v704 = vmax.f32 %v702, %v703
        %v705 = vsel %vm694, %v529, -inf
        %v706 = vmax.f32 %v704, %v705
        %v707 = vsel %vm694, %v545, -inf
        %v708 = vmax.f32 %v706, %v707
        %v709 = vsel %vm694, %v502, -inf
        %v710 = vsel %vm694, %v518, -inf
        %v711 = vmax.f32 %v709, %v710
        %v712 = vsel %vm694, %v534, -inf
        %v713 = vmax.f32 %v711, %v712
        %v714 = vsel %vm694, %v550, -inf
        %v715 = vmax.f32 %v713, %v714
        %v716 = vsel %vm694, %v505, -inf
        %v717 = vsel %vm694, %v521, -inf
        %v718 = vmax.f32 %v716, %v717
        %v719 = vsel %vm694, %v537, -inf
        %v720 = vmax.f32 %v718, %v719
        %v721 = vsel %vm694, %v553, -inf
        %v722 = vmax.f32 %v720, %v721
        %v723 = vpack.c.bf16 %v708, %v701
        %v724 = vpack.c.bf16 %v722, %v715
        %v727 = vunpack.c.l.b16 %v723
        %v728 = vunpack.c.h.b16 %v723
        %v729 = vunpack.c.l.b16 %v724
        %v730 = vunpack.c.h.b16 %v724
        %v731 = vpack.c.b16 %v727, %v727
        %v732 = vpack.c.b16 %v728, %v728
        %v733 = vpack.c.b16 %v729, %v729
        %v734 = vpack.c.b16 %v730, %v730
        %735 = vrot.lane.b32.xlu0 %v731, 120
        %v736 = vpop.permute.xlu0 %735
        %737 = vrot.lane.b32.xlu0 %v732, 120
        %v738 = vpop.permute.xlu0 %737
        %739 = vrot.lane.b32.xlu0 %v733, 120
        %v740 = vpop.permute.xlu0 %739
        %741 = vrot.lane.b32.xlu0 %v734, 120
        %v742 = vpop.permute.xlu0 %741
        %vm747 = vcmask 125952
        %748 = vst.msk [vmem:[%s359] sm:$0xf] %vm747, %v736
        %749 = vst.msk [vmem:[%s359 + $0x4] sm:$0xf] %vm747, %v738
        %750 = vst.msk [vmem:[%s359 + $0x8] sm:$0xf] %vm747, %v740
        %751 = vst.msk [vmem:[%s359 + $0xc] sm:$0xf] %vm747, %v742
        %s752 = sand.u32 %s87, 1
        %s753 = sand.u32 %s87, 1
        %s754 = smul.addr %s753, 64
        %s755 = scalar_lea.vmem [#allocation3], %s754
        %s756 = smul.u32 4, %s21
        %p757 = scmp.lt.s32.totalorder %s20, 1
        %s758 = scalar_select %p757, %s20, 1
        %p759 = scmp.lt.s32.totalorder %s756, 7
        %s760 = scalar_select %p759, %s756, 7
        %s761 = smul.addr %s758, 8
        %s762 = sadd.s32 %s760, %s761
        %s763 = smul.addr %s762, 4
        %s764 = scalar_lea.vmem %s3, %s763
        %s765 = smul.u32 4, %s21
        %p766 = scmp.lt.s32.totalorder %s20, 1
        %s767 = scalar_select %p766, %s20, 1
        %p768 = scmp.lt.s32.totalorder %s765, 7
        %s769 = scalar_select %p768, %s765, 7
        %s770 = smul.addr %s767, 8
        %s771 = sadd.s32 %s769, %s770
        %s772 = smul.addr %s771, 4
        %s773 = scalar_lea.vmem %s4, %s772
        // Predicated region
        $region70: #{tpu_custom_call.1} parent=64 // pred_check
          %p774 = pneg %p97
        $region71: #{tpu_custom_call.1} parent=64 // pred_check_branch
          %776 = sbr.rel (%p774) target = $region73
        $region72: #{tpu_custom_call.1} parent=64 // pred_region
          %s777 = smul.u32 4, %s21
          %s778 = smul.addr %s20, 32
          %s779 = sadd.s32 %s777, %s778
          %s780 = smul.addr %s779, 4
          %s781 = scalar_lea.vmem %s2, %s780
          // Predicated region
          $region74: #{tpu_custom_call.1} parent=72 // pred_check
            _
          $region75: #{tpu_custom_call.1} parent=72 // pred_check_branch
            %783 = sbr.rel (0) target = $region77
          $region76: #{tpu_custom_call.1} parent=72 // pred_region
            // Predicated region
            $region78: #{tpu_custom_call.1} parent=76 // pred_check
              _
            $region79: #{tpu_custom_call.1} parent=76 // pred_check_branch
              %785 = sbr.rel target = $region81
            $region80: #{tpu_custom_call.1} parent=76 // pred_region
              // Predicated region
              $region93: #{tpu_custom_call.1} parent=80 // pred_check
                _
              $region94: #{tpu_custom_call.1} parent=80 // pred_check_branch
                %830 = sbr.rel (0) target = $region96
              $region95: #{tpu_custom_call.1} parent=80 // pred_region
                loop: start=0, step=1, limit=1
                $region97: #{tpu_custom_call.1} parent=95 // loop_pre_header
                  _
                $region98: #{tpu_custom_call.1} parent=95 // loop_header
                  %s832 = sphi 0, %s836
                  %p833 = scmp.ge.s32.totalorder %s832, 1
                  %s837 = sphi %s755, %s755
                  %s838 = sphi %s781, %s781
                $region99: #{tpu_custom_call.1} parent=95 // loop_header_branch
                  %835 = sbr.rel (%p833) target = $region103
                $region100: #{tpu_custom_call.1} parent=95 // loop_body
                  _
                $region101: #{tpu_custom_call.1} parent=95 // loop_footer
                  %s836 = sadd.s32 1, %s832
                $region102: #{tpu_custom_call.1} parent=95 // loop_footer_branch
                  %831 = sbr.rel target = $region98
                $region103: #{tpu_custom_call.1} parent=95 // loop_exit
                  _
                loop: start=0, step=1, limit=1
                $region104: #{tpu_custom_call.1} parent=95 // loop_pre_header
                  _
                $region105: #{tpu_custom_call.1} parent=95 // loop_header
                  %s841 = sphi 0, %s845
                  %p842 = scmp.ge.s32.totalorder %s841, 1
                  %s846 = sphi %s755, %s755
                  %s847 = sphi %s781, %s781
                $region106: #{tpu_custom_call.1} parent=95 // loop_header_branch
                  %844 = sbr.rel (%p842) target = $region110
                $region107: #{tpu_custom_call.1} parent=95 // loop_body
                  %v848 = vld [vmem:[%s846] sm:$0xf]
                  %849 = vst [vmem:[%s847] sm:$0xf] %v848
                  %v850 = vld [vmem:[%s846 + $0x4] sm:$0xf]
                  %851 = vst [vmem:[%s847 + $0x4] sm:$0xf] %v850
                  %v852 = vld [vmem:[%s846 + $0x8] sm:$0xf]
                  %853 = vst [vmem:[%s847 + $0x8] sm:$0xf] %v852
                  %v854 = vld [vmem:[%s846 + $0xc] sm:$0xf]
                  %855 = vst [vmem:[%s847 + $0xc] sm:$0xf] %v854
                  %v856 = vld [vmem:[%s846 + $0x10] sm:$0xf]
                  %857 = vst [vmem:[%s847 + $0x20] sm:$0xf] %v856
                  %v858 = vld [vmem:[%s846 + $0x14] sm:$0xf]
                  %859 = vst [vmem:[%s847 + $0x24] sm:$0xf] %v858
                  %v860 = vld [vmem:[%s846 + $0x18] sm:$0xf]
                  %861 = vst [vmem:[%s847 + $0x28] sm:$0xf] %v860
                  %v862 = vld [vmem:[%s846 + $0x1c] sm:$0xf]
                  %863 = vst [vmem:[%s847 + $0x2c] sm:$0xf] %v862
                  %v864 = vld [vmem:[%s846 + $0x20] sm:$0xf]
                  %865 = vst [vmem:[%s847 + $0x40] sm:$0xf] %v864
                  %v866 = vld [vmem:[%s846 + $0x24] sm:$0xf]
                  %867 = vst [vmem:[%s847 + $0x44] sm:$0xf] %v866
                  %v868 = vld [vmem:[%s846 + $0x28] sm:$0xf]
                  %869 = vst [vmem:[%s847 + $0x48] sm:$0xf] %v868
                  %v870 = vld [vmem:[%s846 + $0x2c] sm:$0xf]
                  %871 = vst [vmem:[%s847 + $0x4c] sm:$0xf] %v870
                  %v872 = vld [vmem:[%s846 + $0x30] sm:$0xf]
                  %873 = vst [vmem:[%s847 + $0x60] sm:$0xf] %v872
                  %v874 = vld [vmem:[%s846 + $0x34] sm:$0xf]
                  %875 = vst [vmem:[%s847 + $0x64] sm:$0xf] %v874
                  %v876 = vld [vmem:[%s846 + $0x38] sm:$0xf]
                  %877 = vst [vmem:[%s847 + $0x68] sm:$0xf] %v876
                  %v878 = vld [vmem:[%s846 + $0x3c] sm:$0xf]
                  %879 = vst [vmem:[%s847 + $0x6c] sm:$0xf] %v878
                $region108: #{tpu_custom_call.1} parent=95 // loop_footer
                  %s845 = sadd.s32 1, %s841
                $region109: #{tpu_custom_call.1} parent=95 // loop_footer_branch
                  %840 = sbr.rel target = $region105
                $region110: #{tpu_custom_call.1} parent=95 // loop_exit
                  _
              $region96: #{tpu_custom_call.1} parent=80 // pred_fallthru
                _
            $region81: #{tpu_custom_call.1} parent=76 // pred_fallthru
              _
            // Predicated region
            $region82: #{tpu_custom_call.1} parent=76 // pred_check
              _
            $region83: #{tpu_custom_call.1} parent=76 // pred_check_branch
              %787 = sbr.rel (0) target = $region85
            $region84: #{tpu_custom_call.1} parent=76 // pred_region
              loop: start=0, step=1, limit=1
              $region86: #{tpu_custom_call.1} parent=84 // loop_pre_header
                _
              $region87: #{tpu_custom_call.1} parent=84 // loop_header
                %s790 = sphi 0, %s794
                %p791 = scmp.ge.s32.totalorder %s790, 1
                %s795 = sphi %s755, %s755
                %s796 = sphi %s781, %s781
              $region88: #{tpu_custom_call.1} parent=84 // loop_header_branch
                %793 = sbr.rel (%p791) target = $region92
              $region89: #{tpu_custom_call.1} parent=84 // loop_body
                %v797 = vld [vmem:[%s795] sm:$0xf]
                %798 = vst [vmem:[%s796] sm:$0xf] %v797
                %v799 = vld [vmem:[%s795 + $0x4] sm:$0xf]
                %800 = vst [vmem:[%s796 + $0x4] sm:$0xf] %v799
                %v801 = vld [vmem:[%s795 + $0x8] sm:$0xf]
                %802 = vst [vmem:[%s796 + $0x8] sm:$0xf] %v801
                %v803 = vld [vmem:[%s795 + $0xc] sm:$0xf]
                %804 = vst [vmem:[%s796 + $0xc] sm:$0xf] %v803
                %v805 = vld [vmem:[%s795 + $0x10] sm:$0xf]
                %806 = vst [vmem:[%s796 + $0x20] sm:$0xf] %v805
                %v807 = vld [vmem:[%s795 + $0x14] sm:$0xf]
                %808 = vst [vmem:[%s796 + $0x24] sm:$0xf] %v807
                %v809 = vld [vmem:[%s795 + $0x18] sm:$0xf]
                %810 = vst [vmem:[%s796 + $0x28] sm:$0xf] %v809
                %v811 = vld [vmem:[%s795 + $0x1c] sm:$0xf]
                %812 = vst [vmem:[%s796 + $0x2c] sm:$0xf] %v811
                %v813 = vld [vmem:[%s795 + $0x20] sm:$0xf]
                %814 = vst [vmem:[%s796 + $0x40] sm:$0xf] %v813
                %v815 = vld [vmem:[%s795 + $0x24] sm:$0xf]
                %816 = vst [vmem:[%s796 + $0x44] sm:$0xf] %v815
                %v817 = vld [vmem:[%s795 + $0x28] sm:$0xf]
                %818 = vst [vmem:[%s796 + $0x48] sm:$0xf] %v817
                %v819 = vld [vmem:[%s795 + $0x2c] sm:$0xf]
                %820 = vst [vmem:[%s796 + $0x4c] sm:$0xf] %v819
                %v821 = vld [vmem:[%s795 + $0x30] sm:$0xf]
                %822 = vst [vmem:[%s796 + $0x60] sm:$0xf] %v821
                %v823 = vld [vmem:[%s795 + $0x34] sm:$0xf]
                %824 = vst [vmem:[%s796 + $0x64] sm:$0xf] %v823
                %v825 = vld [vmem:[%s795 + $0x38] sm:$0xf]
                %826 = vst [vmem:[%s796 + $0x68] sm:$0xf] %v825
                %v827 = vld [vmem:[%s795 + $0x3c] sm:$0xf]
                %828 = vst [vmem:[%s796 + $0x6c] sm:$0xf] %v827
              $region90: #{tpu_custom_call.1} parent=84 // loop_footer
                %s794 = sadd.s32 1, %s790
              $region91: #{tpu_custom_call.1} parent=84 // loop_footer_branch
                %789 = sbr.rel target = $region87
              $region92: #{tpu_custom_call.1} parent=84 // loop_exit
                _
            $region85: #{tpu_custom_call.1} parent=76 // pred_fallthru
              _
          $region77: #{tpu_custom_call.1} parent=72 // pred_fallthru
            _
          %880 = vnop
        $region73: #{tpu_custom_call.1} parent=64 // pred_fallthru
          _
        // Predicated region
        $region111: #{tpu_custom_call.1} parent=64 // pred_check
          %p881 = pneg %p125
        $region112: #{tpu_custom_call.1} parent=64 // pred_check_branch
          %883 = sbr.rel (%p881) target = $region114
        $region113: #{tpu_custom_call.1} parent=64 // pred_region
          %s884 = smul.u32 4, %s21
        $region114: #{tpu_custom_call.1} parent=64 // pred_fallthru
          _
        // Predicated region
        $region115: #{tpu_custom_call.1} parent=64 // pred_check
          %p885 = pneg %p153
        $region116: #{tpu_custom_call.1} parent=64 // pred_check_branch
          %887 = sbr.rel (%p885) target = $region118
        $region117: #{tpu_custom_call.1} parent=64 // pred_region
          %s888 = smul.u32 4, %s21
        $region118: #{tpu_custom_call.1} parent=64 // pred_fallthru
          _
      $region65: #{tpu_custom_call.1} parent=5 // pred_fallthru
        _
      %p889 = scmp.le.s32.totalorder 2, %s11
      // Predicated region
      $region119: #{tpu_custom_call.1} parent=5 // pred_check
        %p890 = pneg %p889
      $region120: #{tpu_custom_call.1} parent=5 // pred_check_branch
        %892 = sbr.rel (%p890) target = $region122
      $region121: #{tpu_custom_call.1} parent=5 // pred_region
        %s893 = ssub.s32 %s11, 2
        // Predicated region
        $region123: #{tpu_custom_call.1} parent=121 // pred_check
          %p894 = pneg %p103
        $region124: #{tpu_custom_call.1} parent=121 // pred_check_branch
          %896 = sbr.rel (%p894) target = $region126
        $region125: #{tpu_custom_call.1} parent=121 // pred_region
          %s897 = sand.u32 %s88, 1
          %s898 = sand.u32 %s88, 1
          %s899 = smul.addr %s898, 64
          %s900 = scalar_lea.vmem [#allocation3], %s899
        $region126: #{tpu_custom_call.1} parent=121 // pred_fallthru
          _
        // Predicated region
        $region127: #{tpu_custom_call.1} parent=121 // pred_check
          %p901 = pneg %p131
        $region128: #{tpu_custom_call.1} parent=121 // pred_check_branch
          %903 = sbr.rel (%p901) target = $region130
        $region129: #{tpu_custom_call.1} parent=121 // pred_region
          %s904 = smul.u32 4, %s23
          %p905 = scmp.lt.s32.totalorder %s22, 1
          %s906 = scalar_select %p905, %s22, 1
          %p907 = scmp.lt.s32.totalorder %s904, 7
          %s908 = scalar_select %p907, %s904, 7
          %s909 = smul.addr %s906, 8
          %s910 = sadd.s32 %s908, %s909
          %s911 = smul.addr %s910, 4
          %s912 = scalar_lea.vmem %s3, %s911
        $region130: #{tpu_custom_call.1} parent=121 // pred_fallthru
          _
        // Predicated region
        $region131: #{tpu_custom_call.1} parent=121 // pred_check
          %p913 = pneg %p159
        $region132: #{tpu_custom_call.1} parent=121 // pred_check_branch
          %915 = sbr.rel (%p913) target = $region134
        $region133: #{tpu_custom_call.1} parent=121 // pred_region
          %s916 = smul.u32 4, %s23
          %p917 = scmp.lt.s32.totalorder %s22, 1
          %s918 = scalar_select %p917, %s22, 1
          %p919 = scmp.lt.s32.totalorder %s916, 7
          %s920 = scalar_select %p919, %s916, 7
          %s921 = smul.addr %s918, 8
          %s922 = sadd.s32 %s920, %s921
          %s923 = smul.addr %s922, 4
          %s924 = scalar_lea.vmem %s4, %s923
        $region134: #{tpu_custom_call.1} parent=121 // pred_fallthru
          _
      $region122: #{tpu_custom_call.1} parent=5 // pred_fallthru
        _
    $region6: #{tpu_custom_call.1} parent=1 // loop_footer
      %s15 = sadd.s32 1, %s11
    $region7: #{tpu_custom_call.1} parent=1 // loop_footer_branch
      %10 = sbr.rel target = $region3
    $region8: #{tpu_custom_call.1} parent=1 // loop_exit
      _

</llo_original>
